<compile_context>
chip_gen: v7x
topology: tpu7x:2x2x1
jax: 0.10.0
libtpu: 0.0.40
codegen_flags: <defaults>
</compile_context>

<pallas_src>
import functools

import jax
import jax.numpy as jnp
from jax.experimental import pallas as pl
from jax.experimental.pallas import tpu as pltpu


def _excite(z, w1_ref, w2_ref):
    """Two bias-free linears + ReLU, f32 accumulation. Weights are pre-oriented (in, out)."""
    h = jnp.maximum(jnp.dot(z, w1_ref[...], preferred_element_type=jnp.float32), 0.0)
    return jnp.maximum(jnp.dot(h, w2_ref[...], preferred_element_type=jnp.float32), 0.0)


def _se_kernel_3d(x_ref, w1_ref, w2_ref, out_ref, *, inv_dim):
    """Lane-aligned path (D % 128 == 0): block is (bt, F, D)."""
    # Squeeze: mean over the embedding dim, accumulated in f32 (constant 1/D multiply).
    z = jnp.sum(x_ref[...].astype(jnp.float32), axis=-1) * inv_dim        # (bt, F)
    a = _excite(z, w1_ref, w2_ref)                                        # (bt, F)
    # Re-weight in the I/O dtype; re-read x_ref instead of keeping an up-cast copy live.
    out_ref[...] = x_ref[...] * a.astype(out_ref.dtype)[:, :, None]


def _se_kernel_folded(x_ref, w1_ref, w2_ref, pool_ref, expand_ref, out_ref, *, inv_dim):
    """General-D path: fields folded into the lane dim, block is (bt, F*D).

    pool   : (F*D, F) 0/1 matrix -> per-field sum via one MXU matmul (no in-kernel reshape)
    expand : (F, F*D) 0/1 matrix -> broadcast the per-field gate back to the folded layout
             (each output element has exactly one nonzero term, so it is exact).
    """
    x = x_ref[...]                                                        # (bt, F*D)
    z = jnp.dot(x, pool_ref[...], preferred_element_type=jnp.float32) * inv_dim   # (bt, F)
    a = _excite(z, w1_ref, w2_ref)                                        # (bt, F)
    a_full = jnp.dot(a, expand_ref[...], preferred_element_type=jnp.float32)       # (bt, F*D)
    out_ref[...] = x_ref[...] * a_full.astype(out_ref.dtype)


def squeeze_excitation(feature_emb, w1, w2, *, block_batch=None,
                       target_tile_bytes=2 << 20, donate_input=False):
    """Pallas implementation of SqueezeExcitationLayer.forward.

    feature_emb : (B, F, D)   f32 or bf16
    w1          : (F, R)  == torch nn.Linear(F, R, bias=False).weight.T
    w2          : (R, F)  == torch nn.Linear(R, F, bias=False).weight.T
    """
    B, F, D = feature_emb.shape
    Fw, R = w1.shape
    Rw, Fw2 = w2.shape
    assert F == Fw == Fw2 and R == Rw

    dtype = feature_emb.dtype
    itemsize = jnp.dtype(dtype).itemsize
    row_bytes = F * D * itemsize

    # --- batch tile selection: target ~2 MiB tiles, keep >=8 grid steps on big batches ---
    if block_batch is None:
        bt = max(1, min(B, target_tile_bytes // row_bytes))
        if B // bt < 8:
            # Prefer enough grid steps to shard the batch axis across v7x's two TensorCores,
            # but never shrink a tile below ~512 KiB (per-step overhead dominates again).
            min_rows = max(1, (512 * 1024) // row_bytes)
            bt = min(B, max(min_rows, pl.cdiv(B, 8)))
    else:
        bt = max(1, min(block_batch, B))
    if bt < B:
        # Sublane-align the batch tile (needed when it becomes the second-to-last dim in the
        # folded 2-D layout). Ragged last block is handled by the cdiv grid + masked writes.
        bt = min(B, ((bt + 7) // 8) * 8)

    grid = (pl.cdiv(B, bt),)
    lane_aligned = (D % 128) == 0

    # --- explicit scoped-VMEM budget: 2x double-buffered (in + out) tiles + f32 temporaries ---
    tile_bytes = bt * row_bytes
    aux_bytes = 0 if lane_aligned else 2 * F * D * 128 * 4          # resident 0/1 matrices (padded)
    vmem_limit = int(min(64 << 20,
                         max(16 << 20,
                             4 * tile_bytes + 3 * bt * F * D * 4 + aux_bytes + (4 << 20))))

    compiler_params = pltpu.CompilerParams(
        dimension_semantics=("parallel",),           # batch tiles are independent (v7x megacore)
        vmem_limit_bytes=vmem_limit,
    )
    io_aliases = {0: 0} if donate_input else {}
    inv_dim = 1.0 / float(D)

    if lane_aligned:
        kernel = functools.partial(_se_kernel_3d, inv_dim=inv_dim)
        grid_spec = pltpu.PrefetchScalarGridSpec(
            num_scalar_prefetch=0,
            grid=grid,
            in_specs=[
                pl.BlockSpec((bt, F, D), lambda b: (b, 0, 0)),       # big batched tile
                pl.BlockSpec((F, R), lambda b: (0, 0)),              # tiny resident weights
                pl.BlockSpec((R, F), lambda b: (0, 0)),
            ],
            out_specs=pl.BlockSpec((bt, F, D), lambda b: (b, 0, 0)),
        )
        return pl.pallas_call(
            kernel,
            out_shape=jax.ShapeDtypeStruct((B, F, D), dtype),
            grid_spec=grid_spec,
            compiler_params=compiler_params,
            input_output_aliases=io_aliases,
        )(feature_emb, w1, w2)

    # D not a multiple of 128: fold fields into the lane dim so the big loads/stores are
    # lane-dense, and use tiny 0/1 matmuls for the field mean / gate broadcast.
    x2d = feature_emb.reshape(B, F * D)
    pool = jnp.repeat(jnp.eye(F, dtype=dtype), D, axis=0)            # (F*D, F)
    expand = jnp.repeat(jnp.eye(F, dtype=jnp.float32), D, axis=1)    # (F, F*D)

    kernel = functools.partial(_se_kernel_folded, inv_dim=inv_dim)
    grid_spec = pltpu.PrefetchScalarGridSpec(
        num_scalar_prefetch=0,
        grid=grid,
        in_specs=[
            pl.BlockSpec((bt, F * D), lambda b: (b, 0)),
            pl.BlockSpec((F, R), lambda b: (0, 0)),
            pl.BlockSpec((R, F), lambda b: (0, 0)),
            pl.BlockSpec((F * D, F), lambda b: (0, 0)),
            pl.BlockSpec((F, F * D), lambda b: (0, 0)),
        ],
        out_specs=pl.BlockSpec((bt, F * D), lambda b: (b, 0)),
    )
    out2d = pl.pallas_call(
        kernel,
        out_shape=jax.ShapeDtypeStruct((B, F * D), dtype),
        grid_spec=grid_spec,
        compiler_params=compiler_params,
        input_output_aliases=io_aliases,
    )(x2d, w1, w2, pool, expand)
    return out2d.reshape(B, F, D)


def _reference(feature_emb, w1, w2):
    z = jnp.mean(feature_emb, axis=-1)
    a = jax.nn.relu(jax.nn.relu(z @ w1) @ w2)
    return feature_emb * a[..., None]


if __name__ == "__main__":
    key = jax.random.PRNGKey(0)
    kx, k1, k2 = jax.random.split(key, 3)

    # Small but representative shapes (demo); production B would use ~2 MiB batch tiles.
    B, num_fields, emb_dim, reduction_ratio = 64, 8, 128, 3
    reduced = max(1, int(num_fields / reduction_ratio))

    feature_emb = jax.random.normal(kx, (B, num_fields, emb_dim), dtype=jnp.float32)
    w1 = jax.random.normal(k1, (num_fields, reduced), dtype=jnp.float32) * 0.1
    w2 = jax.random.normal(k2, (reduced, num_fields), dtype=jnp.float32) * 0.1

    # 1) f32, lane-aligned D (D % 128 == 0).
    out = squeeze_excitation(feature_emb, w1, w2)
    jax.block_until_ready(out)
    ref = _reference(feature_emb, w1, w2)
    assert jnp.allclose(out, ref, atol=1e-5, rtol=1e-4), "f32 lane-aligned path mismatch"

    # 2) bf16 I/O on the same path (halves HBM traffic on real workloads).
    fe_bf16 = feature_emb.astype(jnp.bfloat16)
    out_bf16 = squeeze_excitation(fe_bf16, w1, w2)
    jax.block_until_ready(out_bf16)
    ref_bf16 = _reference(fe_bf16.astype(jnp.float32), w1, w2)
    assert jnp.allclose(out_bf16.astype(jnp.float32), ref_bf16, atol=2e-2, rtol=2e-2), \
        "bf16 path mismatch"

    # 3) D not a multiple of 128 exercises the folded, lane-dense path.
    fe_odd = jax.random.normal(kx, (B, num_fields, 96), dtype=jnp.float32)
    out_odd = squeeze_excitation(fe_odd, w1, w2)
    jax.block_until_ready(out_odd)
    ref_odd = _reference(fe_odd, w1, w2)
    assert jnp.allclose(out_odd, ref_odd, atol=1e-5, rtol=1e-4), "folded path mismatch"

    print("KERNEL_OK")
</pallas_src>

<mosaic_0001>
module attributes {stable_mosaic.version = 11 : i64} {
  func.func @_se_kernel_3d(%arg0: i32, %arg1: memref<64x8x128xf32, #tpu.memory_space<vmem>>, %arg2: memref<8x2xf32, #tpu.memory_space<vmem>>, %arg3: memref<2x8xf32, #tpu.memory_space<vmem>>, %arg4: memref<64x8x128xf32, #tpu.memory_space<vmem>>) attributes {dimension_semantics = [#tpu.dimension_semantics<parallel>], iteration_bounds = array<i64: 1>, scalar_prefetch = 0 : i64, scratch_operands = 0 : i64, tpu.core_type = #tpu.core_type<tc>, window_params = [{transform_indices = @transform_0, window_bounds = array<i64: 64, 8, 128>}, {pipeline_mode = #tpu.pipeline_mode<synchronous>, transform_indices = @transform_1, window_bounds = array<i64: 8, 2>}, {pipeline_mode = #tpu.pipeline_mode<synchronous>, transform_indices = @transform_2, window_bounds = array<i64: 2, 8>}, {transform_indices = @transform_3, window_bounds = array<i64: 64, 8, 128>}]} {
    %c0 = arith.constant 0 : index
    %c0_0 = arith.constant 0 : index
    %c0_1 = arith.constant 0 : index
    %0 = vector.load %arg1[%c0, %c0_0, %c0_1] : memref<64x8x128xf32, #tpu.memory_space<vmem>>, vector<64x8x128xf32>
    %cst = arith.constant dense<0.000000e+00> : vector<64x8xf32>
    %1 = vector.multi_reduction <add>, %0, %cst [2] : vector<64x8x128xf32> to vector<64x8xf32>
    %cst_2 = arith.constant 7.812500e-03 : f32
    %2 = vector.broadcast %cst_2 : f32 to vector<64x8xf32>
    %3 = arith.mulf %1, %2 : vector<64x8xf32>
    %c0_3 = arith.constant 0 : index
    %c0_4 = arith.constant 0 : index
    %4 = vector.load %arg2[%c0_3, %c0_4] : memref<8x2xf32, #tpu.memory_space<vmem>>, vector<8x2xf32>
    %cst_5 = arith.constant dense<0.000000e+00> : vector<64x2xf32>
    %5 = tpu.matmul %3, %4, %cst_5 {dimension_numbers = #tpu.dot_dimension_numbers<[1], [0], [0], [1], [0, 0, 1, 1], [], []>} : vector<64x8xf32>, vector<8x2xf32>, vector<64x2xf32> -> vector<64x2xf32>
    %cst_6 = arith.constant 0.000000e+00 : f32
    %6 = vector.broadcast %cst_6 : f32 to vector<64x2xf32>
    %7 = arith.maximumf %5, %6 : vector<64x2xf32>
    %c0_7 = arith.constant 0 : index
    %c0_8 = arith.constant 0 : index
    %8 = vector.load %arg3[%c0_7, %c0_8] : memref<2x8xf32, #tpu.memory_space<vmem>>, vector<2x8xf32>
    %cst_9 = arith.constant dense<0.000000e+00> : vector<64x8xf32>
    %9 = tpu.matmul %7, %8, %cst_9 {dimension_numbers = #tpu.dot_dimension_numbers<[1], [0], [0], [1], [0, 0, 1, 1], [], []>} : vector<64x2xf32>, vector<2x8xf32>, vector<64x8xf32> -> vector<64x8xf32>
    %cst_10 = arith.constant 0.000000e+00 : f32
    %10 = vector.broadcast %cst_10 : f32 to vector<64x8xf32>
    %11 = arith.maximumf %9, %10 : vector<64x8xf32>
    %c0_11 = arith.constant 0 : index
    %c0_12 = arith.constant 0 : index
    %c0_13 = arith.constant 0 : index
    %12 = vector.load %arg1[%c0_11, %c0_12, %c0_13] : memref<64x8x128xf32, #tpu.memory_space<vmem>>, vector<64x8x128xf32>
    %13 = vector.shape_cast %11 : vector<64x8xf32> to vector<64x8x1xf32>
    %14 = vector.broadcast %13 : vector<64x8x1xf32> to vector<64x8x128xf32>
    %15 = arith.mulf %12, %14 : vector<64x8x128xf32>
    %c0_14 = arith.constant 0 : index
    %c0_15 = arith.constant 0 : index
    %c0_16 = arith.constant 0 : index
    %16 = vector.load %arg4[%c0_14, %c0_15, %c0_16] : memref<64x8x128xf32, #tpu.memory_space<vmem>>, vector<64x8x128xf32>
    tpu.vector_store %arg4[%c0_14, %c0_15, %c0_16], %15 {strides = array<i32>} : memref<64x8x128xf32, #tpu.memory_space<vmem>>, vector<64x8x128xf32>,
    return
  }
  func.func @transform_0(%arg0: i32) -> (i32, i32, i32) {
    %c0_i32 = arith.constant 0 : i32
    %c0_i32_0 = arith.constant 0 : i32
    %c0_i32_1 = arith.constant 0 : i32
    return %arg0, %c0_i32, %c0_i32_0 : i32, i32, i32
  }
  func.func @transform_1(%arg0: i32) -> (i32, i32) {
    %c0_i32 = arith.constant 0 : i32
    %c0_i32_0 = arith.constant 0 : i32
    %c0_i32_1 = arith.constant 0 : i32
    return %c0_i32, %c0_i32_0 : i32, i32
  }
  func.func @transform_2(%arg0: i32) -> (i32, i32) {
    %c0_i32 = arith.constant 0 : i32
    %c0_i32_0 = arith.constant 0 : i32
    %c0_i32_1 = arith.constant 0 : i32
    return %c0_i32, %c0_i32_0 : i32, i32
  }
  func.func @transform_3(%arg0: i32) -> (i32, i32, i32) {
    %c0_i32 = arith.constant 0 : i32
    %c0_i32_0 = arith.constant 0 : i32
    %c0_i32_1 = arith.constant 0 : i32
    return %arg0, %c0_i32, %c0_i32_0 : i32, i32, i32
  }
}

</mosaic_0001>

<llo_original>
// kernel: tpu_custom_call.1
$region0: #{tpu_custom_call.1}
  #allocation0 [shape = 'u32[]', space=smem, size = 0x4, offset = 0x4, fixed_abs, tag = 'smem constant byte address 0x4 - core index']
  #allocation1 [shape = 'u32[144,128]{1,0:T(1,128)}', space=vmem, size = 0x12000, scoped, tag = 'internal scratch']
  %s0 = inlined_call_operand.hbm [shape: f32[64,8,128], index: 0, kind: input, shape index: {}]
  %s1 = inlined_call_operand.vmem [shape: f32[8,2], index: 1, kind: input, shape index: {}]
  %s2 = inlined_call_operand.vmem [shape: f32[2,8], index: 2, kind: input, shape index: {}]
  %s3 = inlined_call_operand.hbm [shape: f32[64,8,128], index: 3, kind: output, shape index: {}]
  %s4 = sld [smem:[#allocation0]]
  $region26: #{tpu_custom_call.1} parent=0
    _
  %s6 = ssub.s32 1, %s4
  %s7 = scalar_select 0, %s6, %s4
  $region1: #{tpu_custom_call.1} parent=0
    #allocation2 [shape = 'u8[262144]{0}', space=vmem, size = 0x40000, scoped, tag = 'input window, operand 0, single buffered']
    #allocation3 [shape = 's32[1]{0}', space=sflag, size = 0x4, scoped, tag = 'scoped memory for tpu_custom_call.1']
    #allocation4 [shape = 's32[1]{0}', space=sflag, size = 0x4, scoped, tag = 'scoped memory for tpu_custom_call.1']
    #allocation5 [shape = 'u8[262144]{0}', space=vmem, size = 0x40000, scoped, tag = 'output window, operand 0, single buffered']
    %8 = vsyncpa [#allocation3], 0
    %9 = vsyncpa [#allocation4], 0
    // Predicated region
    $region2: #{tpu_custom_call.1} parent=1 // pred_check
      _
    $region3: #{tpu_custom_call.1} parent=1 // pred_check_branch
      %11 = sbr.rel (0) target = $region5
    $region4: #{tpu_custom_call.1} parent=1 // pred_region
      %s13 = ssub.s32 8192, 8192
      %14 = vsyncadd [#allocation3], %s13
      %s15 = sshll.u32 [#allocation2], 4
      %s16 = int_to_ptr.vmem [resolvable:$true] %s15
      %21 = dma.hbm_to_vmem [thread:$0]  %s0, 8192, %s16, [#allocation3], 128, 128, 8
    $region5: #{tpu_custom_call.1} parent=1 // pred_fallthru
      _
    // Predicated region
    $region6: #{tpu_custom_call.1} parent=1 // pred_check
      _
    $region7: #{tpu_custom_call.1} parent=1 // pred_check_branch
      %23 = sbr.rel (0) target = $region9
    $region8: #{tpu_custom_call.1} parent=1 // pred_region
      _
    $region9: #{tpu_custom_call.1} parent=1 // pred_fallthru
      _
    // Predicated region
    $region10: #{tpu_custom_call.1} parent=1 // pred_check
      _
    $region11: #{tpu_custom_call.1} parent=1 // pred_check_branch
      %25 = sbr.rel (0) target = $region13
    $region12: #{tpu_custom_call.1} parent=1 // pred_region
      _
    $region13: #{tpu_custom_call.1} parent=1 // pred_fallthru
      _
    // Predicated region
    $region14: #{tpu_custom_call.1} parent=1 // pred_check
      _
    $region15: #{tpu_custom_call.1} parent=1 // pred_check_branch
      %27 = sbr.rel (0) target = $region17
    $region16: #{tpu_custom_call.1} parent=1 // pred_region
      %28 = dma.done [#allocation3], 8192
    $region17: #{tpu_custom_call.1} parent=1 // pred_fallthru
      _
    %v29 = vld [vmem:[#allocation2] sm:$0xff]
    %v30 = vld [vmem:[#allocation2 + $0x8] sm:$0xff]
    %v31 = vld [vmem:[#allocation2 + $0x10] sm:$0xff]
    %v32 = vld [vmem:[#allocation2 + $0x18] sm:$0xff]
    %v33 = vld [vmem:[#allocation2 + $0x20] sm:$0xff]
    %v34 = vld [vmem:[#allocation2 + $0x28] sm:$0xff]
    %v35 = vld [vmem:[#allocation2 + $0x30] sm:$0xff]
    %v36 = vld [vmem:[#allocation2 + $0x38] sm:$0xff]
    %v37 = vld [vmem:[#allocation2 + $0x40] sm:$0xff]
    %v38 = vld [vmem:[#allocation2 + $0x48] sm:$0xff]
    %v39 = vld [vmem:[#allocation2 + $0x50] sm:$0xff]
    %v40 = vld [vmem:[#allocation2 + $0x58] sm:$0xff]
    %v41 = vld [vmem:[#allocation2 + $0x60] sm:$0xff]
    %v42 = vld [vmem:[#allocation2 + $0x68] sm:$0xff]
    %v43 = vld [vmem:[#allocation2 + $0x70] sm:$0xff]
    %v44 = vld [vmem:[#allocation2 + $0x78] sm:$0xff]
    %v45 = vld [vmem:[#allocation2 + $0x80] sm:$0xff]
    %v46 = vld [vmem:[#allocation2 + $0x88] sm:$0xff]
    %v47 = vld [vmem:[#allocation2 + $0x90] sm:$0xff]
    %v48 = vld [vmem:[#allocation2 + $0x98] sm:$0xff]
    %v49 = vld [vmem:[#allocation2 + $0xa0] sm:$0xff]
    %v50 = vld [vmem:[#allocation2 + $0xa8] sm:$0xff]
    %v51 = vld [vmem:[#allocation2 + $0xb0] sm:$0xff]
    %v52 = vld [vmem:[#allocation2 + $0xb8] sm:$0xff]
    %v53 = vld [vmem:[#allocation2 + $0xc0] sm:$0xff]
    %v54 = vld [vmem:[#allocation2 + $0xc8] sm:$0xff]
    %v55 = vld [vmem:[#allocation2 + $0xd0] sm:$0xff]
    %v56 = vld [vmem:[#allocation2 + $0xd8] sm:$0xff]
    %v57 = vld [vmem:[#allocation2 + $0xe0] sm:$0xff]
    %v58 = vld [vmem:[#allocation2 + $0xe8] sm:$0xff]
    %v59 = vld [vmem:[#allocation2 + $0xf0] sm:$0xff]
    %v60 = vld [vmem:[#allocation2 + $0xf8] sm:$0xff]
    %v61 = vld [vmem:[#allocation2 + $0x100] sm:$0xff]
    %v62 = vld [vmem:[#allocation2 + $0x108] sm:$0xff]
    %v63 = vld [vmem:[#allocation2 + $0x110] sm:$0xff]
    %v64 = vld [vmem:[#allocation2 + $0x118] sm:$0xff]
    %v65 = vld [vmem:[#allocation2 + $0x120] sm:$0xff]
    %v66 = vld [vmem:[#allocation2 + $0x128] sm:$0xff]
    %v67 = vld [vmem:[#allocation2 + $0x130] sm:$0xff]
    %v68 = vld [vmem:[#allocation2 + $0x138] sm:$0xff]
    %v69 = vld [vmem:[#allocation2 + $0x140] sm:$0xff]
    %v70 = vld [vmem:[#allocation2 + $0x148] sm:$0xff]
    %v71 = vld [vmem:[#allocation2 + $0x150] sm:$0xff]
    %v72 = vld [vmem:[#allocation2 + $0x158] sm:$0xff]
    %v73 = vld [vmem:[#allocation2 + $0x160] sm:$0xff]
    %v74 = vld [vmem:[#allocation2 + $0x168] sm:$0xff]
    %v75 = vld [vmem:[#allocation2 + $0x170] sm:$0xff]
    %v76 = vld [vmem:[#allocation2 + $0x178] sm:$0xff]
    %v77 = vld [vmem:[#allocation2 + $0x180] sm:$0xff]
    %v78 = vld [vmem:[#allocation2 + $0x188] sm:$0xff]
    %v79 = vld [vmem:[#allocation2 + $0x190] sm:$0xff]
    %v80 = vld [vmem:[#allocation2 + $0x198] sm:$0xff]
    %v81 = vld [vmem:[#allocation2 + $0x1a0] sm:$0xff]
    %v82 = vld [vmem:[#allocation2 + $0x1a8] sm:$0xff]
    %v83 = vld [vmem:[#allocation2 + $0x1b0] sm:$0xff]
    %v84 = vld [vmem:[#allocation2 + $0x1b8] sm:$0xff]
    %v85 = vld [vmem:[#allocation2 + $0x1c0] sm:$0xff]
    %v86 = vld [vmem:[#allocation2 + $0x1c8] sm:$0xff]
    %v87 = vld [vmem:[#allocation2 + $0x1d0] sm:$0xff]
    %v88 = vld [vmem:[#allocation2 + $0x1d8] sm:$0xff]
    %v89 = vld [vmem:[#allocation2 + $0x1e0] sm:$0xff]
    %v90 = vld [vmem:[#allocation2 + $0x1e8] sm:$0xff]
    %v91 = vld [vmem:[#allocation2 + $0x1f0] sm:$0xff]
    %v92 = vld [vmem:[#allocation2 + $0x1f8] sm:$0xff]
    %93 = vadd.xlane.f32.xlu0 %v29
    %v94 = vpop.xlane.xlu0 %93
    %95 = vadd.xlane.f32.xlu0 %v30
    %v96 = vpop.xlane.xlu0 %95
    %97 = vadd.xlane.f32.xlu0 %v31
    %v98 = vpop.xlane.xlu0 %97
    %99 = vadd.xlane.f32.xlu0 %v32
    %v100 = vpop.xlane.xlu0 %99
    %101 = vadd.xlane.f32.xlu0 %v33
    %v102 = vpop.xlane.xlu0 %101
    %103 = vadd.xlane.f32.xlu0 %v34
    %v104 = vpop.xlane.xlu0 %103
    %105 = vadd.xlane.f32.xlu0 %v35
    %v106 = vpop.xlane.xlu0 %105
    %107 = vadd.xlane.f32.xlu0 %v36
    %v108 = vpop.xlane.xlu0 %107
    %109 = vadd.xlane.f32.xlu0 %v37
    %v110 = vpop.xlane.xlu0 %109
    %111 = vadd.xlane.f32.xlu0 %v38
    %v112 = vpop.xlane.xlu0 %111
    %113 = vadd.xlane.f32.xlu0 %v39
    %v114 = vpop.xlane.xlu0 %113
    %115 = vadd.xlane.f32.xlu0 %v40
    %v116 = vpop.xlane.xlu0 %115
    %117 = vadd.xlane.f32.xlu0 %v41
    %v118 = vpop.xlane.xlu0 %117
    %119 = vadd.xlane.f32.xlu0 %v42
    %v120 = vpop.xlane.xlu0 %119
    %121 = vadd.xlane.f32.xlu0 %v43
    %v122 = vpop.xlane.xlu0 %121
    %123 = vadd.xlane.f32.xlu0 %v44
    %v124 = vpop.xlane.xlu0 %123
    %125 = vadd.xlane.f32.xlu0 %v45
    %v126 = vpop.xlane.xlu0 %125
    %127 = vadd.xlane.f32.xlu0 %v46
    %v128 = vpop.xlane.xlu0 %127
    %129 = vadd.xlane.f32.xlu0 %v47
    %v130 = vpop.xlane.xlu0 %129
    %131 = vadd.xlane.f32.xlu0 %v48
    %v132 = vpop.xlane.xlu0 %131
    %133 = vadd.xlane.f32.xlu0 %v49
    %v134 = vpop.xlane.xlu0 %133
    %135 = vadd.xlane.f32.xlu0 %v50
    %v136 = vpop.xlane.xlu0 %135
    %137 = vadd.xlane.f32.xlu0 %v51
    %v138 = vpop.xlane.xlu0 %137
    %139 = vadd.xlane.f32.xlu0 %v52
    %v140 = vpop.xlane.xlu0 %139
    %141 = vadd.xlane.f32.xlu0 %v53
    %v142 = vpop.xlane.xlu0 %141
    %143 = vadd.xlane.f32.xlu0 %v54
    %v144 = vpop.xlane.xlu0 %143
    %145 = vadd.xlane.f32.xlu0 %v55
    %v146 = vpop.xlane.xlu0 %145
    %147 = vadd.xlane.f32.xlu0 %v56
    %v148 = vpop.xlane.xlu0 %147
    %149 = vadd.xlane.f32.xlu0 %v57
    %v150 = vpop.xlane.xlu0 %149
    %151 = vadd.xlane.f32.xlu0 %v58
    %v152 = vpop.xlane.xlu0 %151
    %153 = vadd.xlane.f32.xlu0 %v59
    %v154 = vpop.xlane.xlu0 %153
    %155 = vadd.xlane.f32.xlu0 %v60
    %v156 = vpop.xlane.xlu0 %155
    %157 = vadd.xlane.f32.xlu0 %v61
    %v158 = vpop.xlane.xlu0 %157
    %159 = vadd.xlane.f32.xlu0 %v62
    %v160 = vpop.xlane.xlu0 %159
    %161 = vadd.xlane.f32.xlu0 %v63
    %v162 = vpop.xlane.xlu0 %161
    %163 = vadd.xlane.f32.xlu0 %v64
    %v164 = vpop.xlane.xlu0 %163
    %165 = vadd.xlane.f32.xlu0 %v65
    %v166 = vpop.xlane.xlu0 %165
    %167 = vadd.xlane.f32.xlu0 %v66
    %v168 = vpop.xlane.xlu0 %167
    %169 = vadd.xlane.f32.xlu0 %v67
    %v170 = vpop.xlane.xlu0 %169
    %171 = vadd.xlane.f32.xlu0 %v68
    %v172 = vpop.xlane.xlu0 %171
    %173 = vadd.xlane.f32.xlu0 %v69
    %v174 = vpop.xlane.xlu0 %173
    %175 = vadd.xlane.f32.xlu0 %v70
    %v176 = vpop.xlane.xlu0 %175
    %177 = vadd.xlane.f32.xlu0 %v71
    %v178 = vpop.xlane.xlu0 %177
    %179 = vadd.xlane.f32.xlu0 %v72
    %v180 = vpop.xlane.xlu0 %179
    %181 = vadd.xlane.f32.xlu0 %v73
    %v182 = vpop.xlane.xlu0 %181
    %183 = vadd.xlane.f32.xlu0 %v74
    %v184 = vpop.xlane.xlu0 %183
    %185 = vadd.xlane.f32.xlu0 %v75
    %v186 = vpop.xlane.xlu0 %185
    %187 = vadd.xlane.f32.xlu0 %v76
    %v188 = vpop.xlane.xlu0 %187
    %189 = vadd.xlane.f32.xlu0 %v77
    %v190 = vpop.xlane.xlu0 %189
    %191 = vadd.xlane.f32.xlu0 %v78
    %v192 = vpop.xlane.xlu0 %191
    %193 = vadd.xlane.f32.xlu0 %v79
    %v194 = vpop.xlane.xlu0 %193
    %195 = vadd.xlane.f32.xlu0 %v80
    %v196 = vpop.xlane.xlu0 %195
    %197 = vadd.xlane.f32.xlu0 %v81
    %v198 = vpop.xlane.xlu0 %197
    %199 = vadd.xlane.f32.xlu0 %v82
    %v200 = vpop.xlane.xlu0 %199
    %201 = vadd.xlane.f32.xlu0 %v83
    %v202 = vpop.xlane.xlu0 %201
    %203 = vadd.xlane.f32.xlu0 %v84
    %v204 = vpop.xlane.xlu0 %203
    %205 = vadd.xlane.f32.xlu0 %v85
    %v206 = vpop.xlane.xlu0 %205
    %207 = vadd.xlane.f32.xlu0 %v86
    %v208 = vpop.xlane.xlu0 %207
    %209 = vadd.xlane.f32.xlu0 %v87
    %v210 = vpop.xlane.xlu0 %209
    %211 = vadd.xlane.f32.xlu0 %v88
    %v212 = vpop.xlane.xlu0 %211
    %213 = vadd.xlane.f32.xlu0 %v89
    %v214 = vpop.xlane.xlu0 %213
    %215 = vadd.xlane.f32.xlu0 %v90
    %v216 = vpop.xlane.xlu0 %215
    %217 = vadd.xlane.f32.xlu0 %v91
    %v218 = vpop.xlane.xlu0 %217
    %219 = vadd.xlane.f32.xlu0 %v92
    %v220 = vpop.xlane.xlu0 %219
    %v221 = vmul.f32 %v94, 0.0078125
    %v222 = vmul.f32 %v96, 0.0078125
    %v223 = vmul.f32 %v98, 0.0078125
    %v224 = vmul.f32 %v100, 0.0078125
    %v225 = vmul.f32 %v102, 0.0078125
    %v226 = vmul.f32 %v104, 0.0078125
    %v227 = vmul.f32 %v106, 0.0078125
    %v228 = vmul.f32 %v108, 0.0078125
    %v229 = vmul.f32 %v110, 0.0078125
    %v230 = vmul.f32 %v112, 0.0078125
    %v231 = vmul.f32 %v114, 0.0078125
    %v232 = vmul.f32 %v116, 0.0078125
    %v233 = vmul.f32 %v118, 0.0078125
    %v234 = vmul.f32 %v120, 0.0078125
    %v235 = vmul.f32 %v122, 0.0078125
    %v236 = vmul.f32 %v124, 0.0078125
    %v237 = vmul.f32 %v126, 0.0078125
    %v238 = vmul.f32 %v128, 0.0078125
    %v239 = vmul.f32 %v130, 0.0078125
    %v240 = vmul.f32 %v132, 0.0078125
    %v241 = vmul.f32 %v134, 0.0078125
    %v242 = vmul.f32 %v136, 0.0078125
    %v243 = vmul.f32 %v138, 0.0078125
    %v244 = vmul.f32 %v140, 0.0078125
    %v245 = vmul.f32 %v142, 0.0078125
    %v246 = vmul.f32 %v144, 0.0078125
    %v247 = vmul.f32 %v146, 0.0078125
    %v248 = vmul.f32 %v148, 0.0078125
    %v249 = vmul.f32 %v150, 0.0078125
    %v250 = vmul.f32 %v152, 0.0078125
    %v251 = vmul.f32 %v154, 0.0078125
    %v252 = vmul.f32 %v156, 0.0078125
    %v253 = vmul.f32 %v158, 0.0078125
    %v254 = vmul.f32 %v160, 0.0078125
    %v255 = vmul.f32 %v162, 0.0078125
    %v256 = vmul.f32 %v164, 0.0078125
    %v257 = vmul.f32 %v166, 0.0078125
    %v258 = vmul.f32 %v168, 0.0078125
    %v259 = vmul.f32 %v170, 0.0078125
    %v260 = vmul.f32 %v172, 0.0078125
    %v261 = vmul.f32 %v174, 0.0078125
    %v262 = vmul.f32 %v176, 0.0078125
    %v263 = vmul.f32 %v178, 0.0078125
    %v264 = vmul.f32 %v180, 0.0078125
    %v265 = vmul.f32 %v182, 0.0078125
    %v266 = vmul.f32 %v184, 0.0078125
    %v267 = vmul.f32 %v186, 0.0078125
    %v268 = vmul.f32 %v188, 0.0078125
    %v269 = vmul.f32 %v190, 0.0078125
    %v270 = vmul.f32 %v192, 0.0078125
    %v271 = vmul.f32 %v194, 0.0078125
    %v272 = vmul.f32 %v196, 0.0078125
    %v273 = vmul.f32 %v198, 0.0078125
    %v274 = vmul.f32 %v200, 0.0078125
    %v275 = vmul.f32 %v202, 0.0078125
    %v276 = vmul.f32 %v204, 0.0078125
    %v277 = vmul.f32 %v206, 0.0078125
    %v278 = vmul.f32 %v208, 0.0078125
    %v279 = vmul.f32 %v210, 0.0078125
    %v280 = vmul.f32 %v212, 0.0078125
    %v281 = vmul.f32 %v214, 0.0078125
    %v282 = vmul.f32 %v216, 0.0078125
    %v283 = vmul.f32 %v218, 0.0078125
    %v284 = vmul.f32 %v220, 0.0078125
    %v285 = vld [vmem:[%s1] sm:$0xff]
    %v350 = vlaneseq
    %v351 = vand.u32 %v350, 127
    %v352 = vlaneseq
    %v353 = vshrl.u32 %v352, 7
    %v354 = vsub.s32 %v351, %v353
    %v355 = vrot.slane %v221, %v354
    %v356 = vlaneseq
    %v357 = vshrl.u32 %v356, 7
    %v358 = vsub.s32 %v351, %v357
    %v359 = vrot.slane %v222, %v358
    %v360 = vlaneseq
    %v361 = vshrl.u32 %v360, 7
    %v362 = vsub.s32 %v351, %v361
    %v363 = vrot.slane %v223, %v362
    %v364 = vlaneseq
    %v365 = vshrl.u32 %v364, 7
    %v366 = vsub.s32 %v351, %v365
    %v367 = vrot.slane %v224, %v366
    %v368 = vlaneseq
    %v369 = vshrl.u32 %v368, 7
    %v370 = vsub.s32 %v351, %v369
    %v371 = vrot.slane %v225, %v370
    %v372 = vlaneseq
    %v373 = vshrl.u32 %v372, 7
    %v374 = vsub.s32 %v351, %v373
    %v375 = vrot.slane %v226, %v374
    %v376 = vlaneseq
    %v377 = vshrl.u32 %v376, 7
    %v378 = vsub.s32 %v351, %v377
    %v379 = vrot.slane %v227, %v378
    %v380 = vlaneseq
    %v381 = vshrl.u32 %v380, 7
    %v382 = vsub.s32 %v351, %v381
    %v383 = vrot.slane %v228, %v382
    %v384 = vlaneseq
    %v385 = vshrl.u32 %v384, 7
    %v386 = vsub.s32 %v351, %v385
    %v387 = vrot.slane %v229, %v386
    %v388 = vlaneseq
    %v389 = vshrl.u32 %v388, 7
    %v390 = vsub.s32 %v351, %v389
    %v391 = vrot.slane %v230, %v390
    %v392 = vlaneseq
    %v393 = vshrl.u32 %v392, 7
    %v394 = vsub.s32 %v351, %v393
    %v395 = vrot.slane %v231, %v394
    %v396 = vlaneseq
    %v397 = vshrl.u32 %v396, 7
    %v398 = vsub.s32 %v351, %v397
    %v399 = vrot.slane %v232, %v398
    %v400 = vlaneseq
    %v401 = vshrl.u32 %v400, 7
    %v402 = vsub.s32 %v351, %v401
    %v403 = vrot.slane %v233, %v402
    %v404 = vlaneseq
    %v405 = vshrl.u32 %v404, 7
    %v406 = vsub.s32 %v351, %v405
    %v407 = vrot.slane %v234, %v406
    %v408 = vlaneseq
    %v409 = vshrl.u32 %v408, 7
    %v410 = vsub.s32 %v351, %v409
    %v411 = vrot.slane %v235, %v410
    %v412 = vlaneseq
    %v413 = vshrl.u32 %v412, 7
    %v414 = vsub.s32 %v351, %v413
    %v415 = vrot.slane %v236, %v414
    %v416 = vlaneseq
    %v417 = vshrl.u32 %v416, 7
    %v418 = vsub.s32 %v351, %v417
    %v419 = vrot.slane %v237, %v418
    %v420 = vlaneseq
    %v421 = vshrl.u32 %v420, 7
    %v422 = vsub.s32 %v351, %v421
    %v423 = vrot.slane %v238, %v422
    %v424 = vlaneseq
    %v425 = vshrl.u32 %v424, 7
    %v426 = vsub.s32 %v351, %v425
    %v427 = vrot.slane %v239, %v426
    %v428 = vlaneseq
    %v429 = vshrl.u32 %v428, 7
    %v430 = vsub.s32 %v351, %v429
    %v431 = vrot.slane %v240, %v430
    %v432 = vlaneseq
    %v433 = vshrl.u32 %v432, 7
    %v434 = vsub.s32 %v351, %v433
    %v435 = vrot.slane %v241, %v434
    %v436 = vlaneseq
    %v437 = vshrl.u32 %v436, 7
    %v438 = vsub.s32 %v351, %v437
    %v439 = vrot.slane %v242, %v438
    %v440 = vlaneseq
    %v441 = vshrl.u32 %v440, 7
    %v442 = vsub.s32 %v351, %v441
    %v443 = vrot.slane %v243, %v442
    %v444 = vlaneseq
    %v445 = vshrl.u32 %v444, 7
    %v446 = vsub.s32 %v351, %v445
    %v447 = vrot.slane %v244, %v446
    %v448 = vlaneseq
    %v449 = vshrl.u32 %v448, 7
    %v450 = vsub.s32 %v351, %v449
    %v451 = vrot.slane %v245, %v450
    %v452 = vlaneseq
    %v453 = vshrl.u32 %v452, 7
    %v454 = vsub.s32 %v351, %v453
    %v455 = vrot.slane %v246, %v454
    %v456 = vlaneseq
    %v457 = vshrl.u32 %v456, 7
    %v458 = vsub.s32 %v351, %v457
    %v459 = vrot.slane %v247, %v458
    %v460 = vlaneseq
    %v461 = vshrl.u32 %v460, 7
    %v462 = vsub.s32 %v351, %v461
    %v463 = vrot.slane %v248, %v462
    %v464 = vlaneseq
    %v465 = vshrl.u32 %v464, 7
    %v466 = vsub.s32 %v351, %v465
    %v467 = vrot.slane %v249, %v466
    %v468 = vlaneseq
    %v469 = vshrl.u32 %v468, 7
    %v470 = vsub.s32 %v351, %v469
    %v471 = vrot.slane %v250, %v470
    %v472 = vlaneseq
    %v473 = vshrl.u32 %v472, 7
    %v474 = vsub.s32 %v351, %v473
    %v475 = vrot.slane %v251, %v474
    %v476 = vlaneseq
    %v477 = vshrl.u32 %v476, 7
    %v478 = vsub.s32 %v351, %v477
    %v479 = vrot.slane %v252, %v478
    %v480 = vlaneseq
    %v481 = vshrl.u32 %v480, 7
    %v482 = vsub.s32 %v351, %v481
    %v483 = vrot.slane %v253, %v482
    %v484 = vlaneseq
    %v485 = vshrl.u32 %v484, 7
    %v486 = vsub.s32 %v351, %v485
    %v487 = vrot.slane %v254, %v486
    %v488 = vlaneseq
    %v489 = vshrl.u32 %v488, 7
    %v490 = vsub.s32 %v351, %v489
    %v491 = vrot.slane %v255, %v490
    %v492 = vlaneseq
    %v493 = vshrl.u32 %v492, 7
    %v494 = vsub.s32 %v351, %v493
    %v495 = vrot.slane %v256, %v494
    %v496 = vlaneseq
    %v497 = vshrl.u32 %v496, 7
    %v498 = vsub.s32 %v351, %v497
    %v499 = vrot.slane %v257, %v498
    %v500 = vlaneseq
    %v501 = vshrl.u32 %v500, 7
    %v502 = vsub.s32 %v351, %v501
    %v503 = vrot.slane %v258, %v502
    %v504 = vlaneseq
    %v505 = vshrl.u32 %v504, 7
    %v506 = vsub.s32 %v351, %v505
    %v507 = vrot.slane %v259, %v506
    %v508 = vlaneseq
    %v509 = vshrl.u32 %v508, 7
    %v510 = vsub.s32 %v351, %v509
    %v511 = vrot.slane %v260, %v510
    %v512 = vlaneseq
    %v513 = vshrl.u32 %v512, 7
    %v514 = vsub.s32 %v351, %v513
    %v515 = vrot.slane %v261, %v514
    %v516 = vlaneseq
    %v517 = vshrl.u32 %v516, 7
    %v518 = vsub.s32 %v351, %v517
    %v519 = vrot.slane %v262, %v518
    %v520 = vlaneseq
    %v521 = vshrl.u32 %v520, 7
    %v522 = vsub.s32 %v351, %v521
    %v523 = vrot.slane %v263, %v522
    %v524 = vlaneseq
    %v525 = vshrl.u32 %v524, 7
    %v526 = vsub.s32 %v351, %v525
    %v527 = vrot.slane %v264, %v526
    %v528 = vlaneseq
    %v529 = vshrl.u32 %v528, 7
    %v530 = vsub.s32 %v351, %v529
    %v531 = vrot.slane %v265, %v530
    %v532 = vlaneseq
    %v533 = vshrl.u32 %v532, 7
    %v534 = vsub.s32 %v351, %v533
    %v535 = vrot.slane %v266, %v534
    %v536 = vlaneseq
    %v537 = vshrl.u32 %v536, 7
    %v538 = vsub.s32 %v351, %v537
    %v539 = vrot.slane %v267, %v538
    %v540 = vlaneseq
    %v541 = vshrl.u32 %v540, 7
    %v542 = vsub.s32 %v351, %v541
    %v543 = vrot.slane %v268, %v542
    %v544 = vlaneseq
    %v545 = vshrl.u32 %v544, 7
    %v546 = vsub.s32 %v351, %v545
    %v547 = vrot.slane %v269, %v546
    %v548 = vlaneseq
    %v549 = vshrl.u32 %v548, 7
    %v550 = vsub.s32 %v351, %v549
    %v551 = vrot.slane %v270, %v550
    %v552 = vlaneseq
    %v553 = vshrl.u32 %v552, 7
    %v554 = vsub.s32 %v351, %v553
    %v555 = vrot.slane %v271, %v554
    %v556 = vlaneseq
    %v557 = vshrl.u32 %v556, 7
    %v558 = vsub.s32 %v351, %v557
    %v559 = vrot.slane %v272, %v558
    %v560 = vlaneseq
    %v561 = vshrl.u32 %v560, 7
    %v562 = vsub.s32 %v351, %v561
    %v563 = vrot.slane %v273, %v562
    %v564 = vlaneseq
    %v565 = vshrl.u32 %v564, 7
    %v566 = vsub.s32 %v351, %v565
    %v567 = vrot.slane %v274, %v566
    %v568 = vlaneseq
    %v569 = vshrl.u32 %v568, 7
    %v570 = vsub.s32 %v351, %v569
    %v571 = vrot.slane %v275, %v570
    %v572 = vlaneseq
    %v573 = vshrl.u32 %v572, 7
    %v574 = vsub.s32 %v351, %v573
    %v575 = vrot.slane %v276, %v574
    %v576 = vlaneseq
    %v577 = vshrl.u32 %v576, 7
    %v578 = vsub.s32 %v351, %v577
    %v579 = vrot.slane %v277, %v578
    %v580 = vlaneseq
    %v581 = vshrl.u32 %v580, 7
    %v582 = vsub.s32 %v351, %v581
    %v583 = vrot.slane %v278, %v582
    %v584 = vlaneseq
    %v585 = vshrl.u32 %v584, 7
    %v586 = vsub.s32 %v351, %v585
    %v587 = vrot.slane %v279, %v586
    %v588 = vlaneseq
    %v589 = vshrl.u32 %v588, 7
    %v590 = vsub.s32 %v351, %v589
    %v591 = vrot.slane %v280, %v590
    %v592 = vlaneseq
    %v593 = vshrl.u32 %v592, 7
    %v594 = vsub.s32 %v351, %v593
    %v595 = vrot.slane %v281, %v594
    %v596 = vlaneseq
    %v597 = vshrl.u32 %v596, 7
    %v598 = vsub.s32 %v351, %v597
    %v599 = vrot.slane %v282, %v598
    %v600 = vlaneseq
    %v601 = vshrl.u32 %v600, 7
    %v602 = vsub.s32 %v351, %v601
    %v603 = vrot.slane %v283, %v602
    %v604 = vlaneseq
    %v605 = vshrl.u32 %v604, 7
    %v606 = vsub.s32 %v351, %v605
    %v607 = vrot.slane %v284, %v606
    %vm608 = vcmask 1041409
    %v609 = vsel %vm608, %v359, %v355
    %vm610 = vcmask 1042434
    %v611 = vsel %vm610, %v363, %v609
    %vm612 = vcmask 1043459
    %v613 = vsel %vm612, %v367, %v611
    %vm614 = vcmask 1044484
    %v615 = vsel %vm614, %v371, %v613
    %vm616 = vcmask 1045509
    %v617 = vsel %vm616, %v375, %v615
    %vm618 = vcmask 1046534
    %v619 = vsel %vm618, %v379, %v617
    %vm620 = vcmask 1047559
    %v621 = vsel %vm620, %v383, %v619
    %v622 = vsel %vm608, %v391, %v387
    %v623 = vsel %vm610, %v395, %v622
    %v624 = vsel %vm612, %v399, %v623
    %v625 = vsel %vm614, %v403, %v624
    %v626 = vsel %vm616, %v407, %v625
    %v627 = vsel %vm618, %v411, %v626
    %v628 = vsel %vm620, %v415, %v627
    %v629 = vsel %vm608, %v423, %v419
    %v630 = vsel %vm610, %v427, %v629
    %v631 = vsel %vm612, %v431, %v630
    %v632 = vsel %vm614, %v435, %v631
    %v633 = vsel %vm616, %v439, %v632
    %v634 = vsel %vm618, %v443, %v633
    %v635 = vsel %vm620, %v447, %v634
    %v636 = vsel %vm608, %v455, %v451
    %v637 = vsel %vm610, %v459, %v636
    %v638 = vsel %vm612, %v463, %v637
    %v639 = vsel %vm614, %v467, %v638
    %v640 = vsel %vm616, %v471, %v639
    %v641 = vsel %vm618, %v475, %v640
    %v642 = vsel %vm620, %v479, %v641
    %v643 = vsel %vm608, %v487, %v483
    %v644 = vsel %vm610, %v491, %v643
    %v645 = vsel %vm612, %v495, %v644
    %v646 = vsel %vm614, %v499, %v645
    %v647 = vsel %vm616, %v503, %v646
    %v648 = vsel %vm618, %v507, %v647
    %v649 = vsel %vm620, %v511, %v648
    %v650 = vsel %vm608, %v519, %v515
    %v651 = vsel %vm610, %v523, %v650
    %v652 = vsel %vm612, %v527, %v651
    %v653 = vsel %vm614, %v531, %v652
    %v654 = vsel %vm616, %v535, %v653
    %v655 = vsel %vm618, %v539, %v654
    %v656 = vsel %vm620, %v543, %v655
    %v657 = vsel %vm608, %v551, %v547
    %v658 = vsel %vm610, %v555, %v657
    %v659 = vsel %vm612, %v559, %v658
    %v660 = vsel %vm614, %v563, %v659
    %v661 = vsel %vm616, %v567, %v660
    %v662 = vsel %vm618, %v571, %v661
    %v663 = vsel %vm620, %v575, %v662
    %v664 = vsel %vm608, %v583, %v579
    %v665 = vsel %vm610, %v587, %v664
    %v666 = vsel %vm612, %v591, %v665
    %v667 = vsel %vm614, %v595, %v666
    %v668 = vsel %vm616, %v599, %v667
    %v669 = vsel %vm618, %v603, %v668
    %v670 = vsel %vm620, %v607, %v669
    %vm671 = vcmask 64512
    %v672 = vsel %vm671, %v621, 0
    %v674 = vsel %vm671, %v628, 0
    %v676 = vsel %vm671, %v635, 0
    %v678 = vsel %vm671, %v642, 0
    %v680 = vsel %vm671, %v649, 0
    %v682 = vsel %vm671, %v656, 0
    %v684 = vsel %vm671, %v663, 0
    %v686 = vsel %vm671, %v670, 0
    %688 = vmatprep.subr.mxu0 0.0
    %689 = vmatpush1.msra.mxu0 %v285
    %690 = vmatprep.subr.mxu0 0.0
    %691 = vmatpush1.msra.mxu0 0.0
    %692 = vmatprep.subr.mxu0 0.0
    %693 = vmatpush1.msra.mxu0 0.0
    %694 = vmatprep.subr.mxu0 0.0
    %695 = vmatpush1.msra.mxu0 0.0
    %696 = vmatprep.subr.mxu0 0.0
    %697 = vmatpush1.msra.mxu0 0.0
    %698 = vmatprep.subr.mxu0 0.0
    %699 = vmatpush1.msra.mxu0 0.0
    %700 = vmatprep.subr.mxu0 0.0
    %701 = vmatpush1.msra.mxu0 0.0
    %702 = vmatprep.subr.mxu0 0.0
    %703 = vmatpush1.msra.mxu0 0.0
    %704 = vmatprep.subr.mxu0 0.0
    %705 = vmatpush1.msra.mxu0 0.0
    %706 = vmatprep.subr.mxu0 0.0
    %707 = vmatpush1.msra.mxu0 0.0
    %708 = vmatprep.subr.mxu0 0.0
    %709 = vmatpush1.msra.mxu0 0.0
    %710 = vmatprep.subr.mxu0 0.0
    %711 = vmatpush1.msra.mxu0 0.0
    %712 = vmatprep.subr.mxu0 0.0
    %713 = vmatpush1.msra.mxu0 0.0
    %714 = vmatprep.subr.mxu0 0.0
    %715 = vmatpush1.msra.mxu0 0.0
    %716 = vmatprep.subr.mxu0 0.0
    %717 = vmatpush1.msra.mxu0 0.0
    %718 = vmatprep.subr.mxu0 0.0
    %719 = vmatpush1.msra.mxu0 0.0
    %720 = vmatprep.subr.mxu0 0.0
    %721 = vmatpush1.msra.mxu0 0.0
    %722 = vmatprep.subr.mxu0 0.0
    %723 = vmatpush1.msra.mxu0 0.0
    %724 = vmatprep.subr.mxu0 0.0
    %725 = vmatpush1.msra.mxu0 0.0
    %726 = vmatprep.subr.mxu0 0.0
    %727 = vmatpush1.msra.mxu0 0.0
    %728 = vmatprep.subr.mxu0 0.0
    %729 = vmatpush1.msra.mxu0 0.0
    %730 = vmatprep.subr.mxu0 0.0
    %731 = vmatpush1.msra.mxu0 0.0
    %732 = vmatprep.subr.mxu0 0.0
    %733 = vmatpush1.msra.mxu0 0.0
    %734 = vmatprep.subr.mxu0 0.0
    %735 = vmatpush1.msra.mxu0 0.0
    %736 = vmatprep.subr.mxu0 0.0
    %737 = vmatpush1.msra.mxu0 0.0
    %738 = vmatprep.subr.mxu0 0.0
    %739 = vmatpush1.msra.mxu0 0.0
    %740 = vmatprep.subr.mxu0 0.0
    %741 = vmatpush1.msra.mxu0 0.0
    %742 = vmatprep.subr.mxu0 0.0
    %743 = vmatpush1.msra.mxu0 0.0
    %744 = vmatprep.subr.mxu0 0.0
    %745 = vmatpush1.msra.mxu0 0.0
    %746 = vmatprep.subr.mxu0 0.0
    %747 = vmatpush1.msra.mxu0 0.0
    %748 = vmatprep.subr.mxu0 0.0
    %749 = vmatpush1.msra.mxu0 0.0
    %750 = vmatprep.subr.mxu0 0.0
    %751 = vmatpush1.msra.mxu0 0.0
    %752 = vmatprep.mubr.f32.mxu0 0.0
    %753 = vmatmul.mubr.f32.gmra.mrb[0].mxu0 %v672
    %v754 = vpop.f32.mrb[0].mxu0
    %v755 = vadd.f32 0.0, %v754
    %v756 = vpop.f32.mrb[0].mxu0
    %757 = vmatprep.mubr.f32.mxu0 0.0
    %758 = vmatmul.mubr.f32.gmra.mrb[0].mxu0 %v674
    %v759 = vpop.f32.mrb[0].mxu0
    %v760 = vadd.f32 0.0, %v759
    %v761 = vpop.f32.mrb[0].mxu0
    %762 = vmatprep.mubr.f32.mxu0 0.0
    %763 = vmatmul.mubr.f32.gmra.mrb[0].mxu0 %v676
    %v764 = vpop.f32.mrb[0].mxu0
    %v765 = vadd.f32 0.0, %v764
    %v766 = vpop.f32.mrb[0].mxu0
    %767 = vmatprep.mubr.f32.mxu0 0.0
    %768 = vmatmul.mubr.f32.gmra.mrb[0].mxu0 %v678
    %v769 = vpop.f32.mrb[0].mxu0
    %v770 = vadd.f32 0.0, %v769
    %v771 = vpop.f32.mrb[0].mxu0
    %772 = vmatprep.mubr.f32.mxu0 0.0
    %773 = vmatmul.mubr.f32.gmra.mrb[0].mxu0 %v680
    %v774 = vpop.f32.mrb[0].mxu0
    %v775 = vadd.f32 0.0, %v774
    %v776 = vpop.f32.mrb[0].mxu0
    %777 = vmatprep.mubr.f32.mxu0 0.0
    %778 = vmatmul.mubr.f32.gmra.mrb[0].mxu0 %v682
    %v779 = vpop.f32.mrb[0].mxu0
    %v780 = vadd.f32 0.0, %v779
    %v781 = vpop.f32.mrb[0].mxu0
    %782 = vmatprep.mubr.f32.mxu0 0.0
    %783 = vmatmul.mubr.f32.gmra.mrb[0].mxu0 %v684
    %v784 = vpop.f32.mrb[0].mxu0
    %v785 = vadd.f32 0.0, %v784
    %v786 = vpop.f32.mrb[0].mxu0
    %787 = vmatprep.mubr.f32.mxu0 0.0
    %788 = vmatmul.mubr.f32.gmra.mrb[0].mxu0 %v686
    %v789 = vpop.f32.mrb[0].mxu0
    %v790 = vadd.f32 0.0, %v789
    %v791 = vpop.f32.mrb[0].mxu0
    %792 = vdwg.mxu0
    %v793 = vmax.f32 %v755, 0.0
    %v794 = vmax.f32 %v760, 0.0
    %v795 = vmax.f32 %v765, 0.0
    %v796 = vmax.f32 %v770, 0.0
    %v797 = vmax.f32 %v775, 0.0
    %v798 = vmax.f32 %v780, 0.0
    %v799 = vmax.f32 %v785, 0.0
    %v800 = vmax.f32 %v790, 0.0
    %v801 = vld [vmem:[%s2] sm:$0x3]
    %vm802 = vcmask 15360
    %v804 = vsel %vm802, %v793, 0
    %v807 = vsel %vm802, %v794, 0
    %v810 = vsel %vm802, %v795, 0
    %v813 = vsel %vm802, %v796, 0
    %v816 = vsel %vm802, %v797, 0
    %v819 = vsel %vm802, %v798, 0
    %v822 = vsel %vm802, %v799, 0
    %v825 = vsel %vm802, %v800, 0
    %vm827 = vcmask 1041408
    %v829 = vsel %vm827, %v801, 0
    %831 = vmatprep.subr.mxu0 0.0
    %832 = vmatpush1.msra.mxu0 %v829
    %833 = vmatprep.subr.mxu0 0.0
    %834 = vmatpush1.msra.mxu0 0.0
    %835 = vmatprep.subr.mxu0 0.0
    %836 = vmatpush1.msra.mxu0 0.0
    %837 = vmatprep.subr.mxu0 0.0
    %838 = vmatpush1.msra.mxu0 0.0
    %839 = vmatprep.subr.mxu0 0.0
    %840 = vmatpush1.msra.mxu0 0.0
    %841 = vmatprep.subr.mxu0 0.0
    %842 = vmatpush1.msra.mxu0 0.0
    %843 = vmatprep.subr.mxu0 0.0
    %844 = vmatpush1.msra.mxu0 0.0
    %845 = vmatprep.subr.mxu0 0.0
    %846 = vmatpush1.msra.mxu0 0.0
    %847 = vmatprep.subr.mxu0 0.0
    %848 = vmatpush1.msra.mxu0 0.0
    %849 = vmatprep.subr.mxu0 0.0
    %850 = vmatpush1.msra.mxu0 0.0
    %851 = vmatprep.subr.mxu0 0.0
    %852 = vmatpush1.msra.mxu0 0.0
    %853 = vmatprep.subr.mxu0 0.0
    %854 = vmatpush1.msra.mxu0 0.0
    %855 = vmatprep.subr.mxu0 0.0
    %856 = vmatpush1.msra.mxu0 0.0
    %857 = vmatprep.subr.mxu0 0.0
    %858 = vmatpush1.msra.mxu0 0.0
    %859 = vmatprep.subr.mxu0 0.0
    %860 = vmatpush1.msra.mxu0 0.0
    %861 = vmatprep.subr.mxu0 0.0
    %862 = vmatpush1.msra.mxu0 0.0
    %863 = vmatprep.subr.mxu0 0.0
    %864 = vmatpush1.msra.mxu0 0.0
    %865 = vmatprep.subr.mxu0 0.0
    %866 = vmatpush1.msra.mxu0 0.0
    %867 = vmatprep.subr.mxu0 0.0
    %868 = vmatpush1.msra.mxu0 0.0
    %869 = vmatprep.subr.mxu0 0.0
    %870 = vmatpush1.msra.mxu0 0.0
    %871 = vmatprep.subr.mxu0 0.0
    %872 = vmatpush1.msra.mxu0 0.0
    %873 = vmatprep.subr.mxu0 0.0
    %874 = vmatpush1.msra.mxu0 0.0
    %875 = vmatprep.subr.mxu0 0.0
    %876 = vmatpush1.msra.mxu0 0.0
    %877 = vmatprep.subr.mxu0 0.0
    %878 = vmatpush1.msra.mxu0 0.0
    %879 = vmatprep.subr.mxu0 0.0
    %880 = vmatpush1.msra.mxu0 0.0
    %881 = vmatprep.subr.mxu0 0.0
    %882 = vmatpush1.msra.mxu0 0.0
    %883 = vmatprep.subr.mxu0 0.0
    %884 = vmatpush1.msra.mxu0 0.0
    %885 = vmatprep.subr.mxu0 0.0
    %886 = vmatpush1.msra.mxu0 0.0
    %887 = vmatprep.subr.mxu0 0.0
    %888 = vmatpush1.msra.mxu0 0.0
    %889 = vmatprep.subr.mxu0 0.0
    %890 = vmatpush1.msra.mxu0 0.0
    %891 = vmatprep.subr.mxu0 0.0
    %892 = vmatpush1.msra.mxu0 0.0
    %893 = vmatprep.subr.mxu0 0.0
    %894 = vmatpush1.msra.mxu0 0.0
    %895 = vmatprep.mubr.f32.mxu0 0.0
    %896 = vmatmul.mubr.f32.gmra.mrb[0].mxu0 %v804
    %v897 = vpop.f32.mrb[0].mxu0
    %v898 = vadd.f32 0.0, %v897
    %v899 = vpop.f32.mrb[0].mxu0
    %900 = vmatprep.mubr.f32.mxu0 0.0
    %901 = vmatmul.mubr.f32.gmra.mrb[0].mxu0 %v807
    %v902 = vpop.f32.mrb[0].mxu0
    %v903 = vadd.f32 0.0, %v902
    %v904 = vpop.f32.mrb[0].mxu0
    %905 = vmatprep.mubr.f32.mxu0 0.0
    %906 = vmatmul.mubr.f32.gmra.mrb[0].mxu0 %v810
    %v907 = vpop.f32.mrb[0].mxu0
    %v908 = vadd.f32 0.0, %v907
    %v909 = vpop.f32.mrb[0].mxu0
    %910 = vmatprep.mubr.f32.mxu0 0.0
    %911 = vmatmul.mubr.f32.gmra.mrb[0].mxu0 %v813
    %v912 = vpop.f32.mrb[0].mxu0
    %v913 = vadd.f32 0.0, %v912
    %v914 = vpop.f32.mrb[0].mxu0
    %915 = vmatprep.mubr.f32.mxu0 0.0
    %916 = vmatmul.mubr.f32.gmra.mrb[0].mxu0 %v816
    %v917 = vpop.f32.mrb[0].mxu0
    %v918 = vadd.f32 0.0, %v917
    %v919 = vpop.f32.mrb[0].mxu0
    %920 = vmatprep.mubr.f32.mxu0 0.0
    %921 = vmatmul.mubr.f32.gmra.mrb[0].mxu0 %v819
    %v922 = vpop.f32.mrb[0].mxu0
    %v923 = vadd.f32 0.0, %v922
    %v924 = vpop.f32.mrb[0].mxu0
    %925 = vmatprep.mubr.f32.mxu0 0.0
    %926 = vmatmul.mubr.f32.gmra.mrb[0].mxu0 %v822
    %v927 = vpop.f32.mrb[0].mxu0
    %v928 = vadd.f32 0.0, %v927
    %v929 = vpop.f32.mrb[0].mxu0
    %930 = vmatprep.mubr.f32.mxu0 0.0
    %931 = vmatmul.mubr.f32.gmra.mrb[0].mxu0 %v825
    %v932 = vpop.f32.mrb[0].mxu0
    %v933 = vadd.f32 0.0, %v932
    %v934 = vpop.f32.mrb[0].mxu0
    %935 = vdwg.mxu0
    %v936 = vmax.f32 %v898, 0.0
    %v937 = vmax.f32 %v903, 0.0
    %v938 = vmax.f32 %v908, 0.0
    %v939 = vmax.f32 %v913, 0.0
    %v940 = vmax.f32 %v918, 0.0
    %v941 = vmax.f32 %v923, 0.0
    %v942 = vmax.f32 %v928, 0.0
    %v943 = vmax.f32 %v933, 0.0
    %v944 = vlaneseq
    %v945 = vshrl.u32 %v944, 7
    %v946 = vsub.s32 0, %v945
    %v947 = vrot.slane %v936, %v946
    %949 = vbcast.lane.b32.xlu0 %v947, 256
    %v950 = vpop.permute.xlu0 %949
    %v951 = vlaneseq
    %v952 = vshrl.u32 %v951, 7
    %v953 = vsub.s32 1, %v952
    %v954 = vrot.slane %v936, %v953
    %956 = vbcast.lane.b32.xlu0 %v954, 256
    %v957 = vpop.permute.xlu0 %956
    %v958 = vlaneseq
    %v959 = vshrl.u32 %v958, 7
    %v960 = vsub.s32 2, %v959
    %v961 = vrot.slane %v936, %v960
    %963 = vbcast.lane.b32.xlu0 %v961, 256
    %v964 = vpop.permute.xlu0 %963
    %v965 = vlaneseq
    %v966 = vshrl.u32 %v965, 7
    %v967 = vsub.s32 3, %v966
    %v968 = vrot.slane %v936, %v967
    %970 = vbcast.lane.b32.xlu0 %v968, 256
    %v971 = vpop.permute.xlu0 %970
    %v972 = vlaneseq
    %v973 = vshrl.u32 %v972, 7
    %v974 = vsub.s32 4, %v973
    %v975 = vrot.slane %v936, %v974
    %977 = vbcast.lane.b32.xlu0 %v975, 256
    %v978 = vpop.permute.xlu0 %977
    %v979 = vlaneseq
    %v980 = vshrl.u32 %v979, 7
    %v981 = vsub.s32 5, %v980
    %v982 = vrot.slane %v936, %v981
    %984 = vbcast.lane.b32.xlu0 %v982, 256
    %v985 = vpop.permute.xlu0 %984
    %v986 = vlaneseq
    %v987 = vshrl.u32 %v986, 7
    %v988 = vsub.s32 6, %v987
    %v989 = vrot.slane %v936, %v988
    %991 = vbcast.lane.b32.xlu0 %v989, 256
    %v992 = vpop.permute.xlu0 %991
    %v993 = vlaneseq
    %v994 = vshrl.u32 %v993, 7
    %v995 = vsub.s32 7, %v994
    %v996 = vrot.slane %v936, %v995
    %998 = vbcast.lane.b32.xlu0 %v996, 256
    %v999 = vpop.permute.xlu0 %998
    %v1000 = vlaneseq
    %v1001 = vshrl.u32 %v1000, 7
    %v1002 = vsub.s32 0, %v1001
    %v1003 = vrot.slane %v937, %v1002
    %1005 = vbcast.lane.b32.xlu0 %v1003, 256
    %v1006 = vpop.permute.xlu0 %1005
    %v1007 = vlaneseq
    %v1008 = vshrl.u32 %v1007, 7
    %v1009 = vsub.s32 1, %v1008
    %v1010 = vrot.slane %v937, %v1009
    %1012 = vbcast.lane.b32.xlu0 %v1010, 256
    %v1013 = vpop.permute.xlu0 %1012
    %v1014 = vlaneseq
    %v1015 = vshrl.u32 %v1014, 7
    %v1016 = vsub.s32 2, %v1015
    %v1017 = vrot.slane %v937, %v1016
    %1019 = vbcast.lane.b32.xlu0 %v1017, 256
    %v1020 = vpop.permute.xlu0 %1019
    %v1021 = vlaneseq
    %v1022 = vshrl.u32 %v1021, 7
    %v1023 = vsub.s32 3, %v1022
    %v1024 = vrot.slane %v937, %v1023
    %1026 = vbcast.lane.b32.xlu0 %v1024, 256
    %v1027 = vpop.permute.xlu0 %1026
    %v1028 = vlaneseq
    %v1029 = vshrl.u32 %v1028, 7
    %v1030 = vsub.s32 4, %v1029
    %v1031 = vrot.slane %v937, %v1030
    %1033 = vbcast.lane.b32.xlu0 %v1031, 256
    %v1034 = vpop.permute.xlu0 %1033
    %v1035 = vlaneseq
    %v1036 = vshrl.u32 %v1035, 7
    %v1037 = vsub.s32 5, %v1036
    %v1038 = vrot.slane %v937, %v1037
    %1040 = vbcast.lane.b32.xlu0 %v1038, 256
    %v1041 = vpop.permute.xlu0 %1040
    %v1042 = vlaneseq
    %v1043 = vshrl.u32 %v1042, 7
    %v1044 = vsub.s32 6, %v1043
    %v1045 = vrot.slane %v937, %v1044
    %1047 = vbcast.lane.b32.xlu0 %v1045, 256
    %v1048 = vpop.permute.xlu0 %1047
    %v1049 = vlaneseq
    %v1050 = vshrl.u32 %v1049, 7
    %v1051 = vsub.s32 7, %v1050
    %v1052 = vrot.slane %v937, %v1051
    %1054 = vbcast.lane.b32.xlu0 %v1052, 256
    %v1055 = vpop.permute.xlu0 %1054
    %v1056 = vlaneseq
    %v1057 = vshrl.u32 %v1056, 7
    %v1058 = vsub.s32 0, %v1057
    %v1059 = vrot.slane %v938, %v1058
    %1061 = vbcast.lane.b32.xlu0 %v1059, 256
    %v1062 = vpop.permute.xlu0 %1061
    %v1063 = vlaneseq
    %v1064 = vshrl.u32 %v1063, 7
    %v1065 = vsub.s32 1, %v1064
    %v1066 = vrot.slane %v938, %v1065
    %1068 = vbcast.lane.b32.xlu0 %v1066, 256
    %v1069 = vpop.permute.xlu0 %1068
    %v1070 = vlaneseq
    %v1071 = vshrl.u32 %v1070, 7
    %v1072 = vsub.s32 2, %v1071
    %v1073 = vrot.slane %v938, %v1072
    %1075 = vbcast.lane.b32.xlu0 %v1073, 256
    %v1076 = vpop.permute.xlu0 %1075
    %v1077 = vlaneseq
    %v1078 = vshrl.u32 %v1077, 7
    %v1079 = vsub.s32 3, %v1078
    %v1080 = vrot.slane %v938, %v1079
    %1082 = vbcast.lane.b32.xlu0 %v1080, 256
    %v1083 = vpop.permute.xlu0 %1082
    %v1084 = vlaneseq
    %v1085 = vshrl.u32 %v1084, 7
    %v1086 = vsub.s32 4, %v1085
    %v1087 = vrot.slane %v938, %v1086
    %1089 = vbcast.lane.b32.xlu0 %v1087, 256
    %v1090 = vpop.permute.xlu0 %1089
    %v1091 = vlaneseq
    %v1092 = vshrl.u32 %v1091, 7
    %v1093 = vsub.s32 5, %v1092
    %v1094 = vrot.slane %v938, %v1093
    %1096 = vbcast.lane.b32.xlu0 %v1094, 256
    %v1097 = vpop.permute.xlu0 %1096
    %v1098 = vlaneseq
    %v1099 = vshrl.u32 %v1098, 7
    %v1100 = vsub.s32 6, %v1099
    %v1101 = vrot.slane %v938, %v1100
    %1103 = vbcast.lane.b32.xlu0 %v1101, 256
    %v1104 = vpop.permute.xlu0 %1103
    %v1105 = vlaneseq
    %v1106 = vshrl.u32 %v1105, 7
    %v1107 = vsub.s32 7, %v1106
    %v1108 = vrot.slane %v938, %v1107
    %1110 = vbcast.lane.b32.xlu0 %v1108, 256
    %v1111 = vpop.permute.xlu0 %1110
    %v1112 = vlaneseq
    %v1113 = vshrl.u32 %v1112, 7
    %v1114 = vsub.s32 0, %v1113
    %v1115 = vrot.slane %v939, %v1114
    %1117 = vbcast.lane.b32.xlu0 %v1115, 256
    %v1118 = vpop.permute.xlu0 %1117
    %v1119 = vlaneseq
    %v1120 = vshrl.u32 %v1119, 7
    %v1121 = vsub.s32 1, %v1120
    %v1122 = vrot.slane %v939, %v1121
    %1124 = vbcast.lane.b32.xlu0 %v1122, 256
    %v1125 = vpop.permute.xlu0 %1124
    %v1126 = vlaneseq
    %v1127 = vshrl.u32 %v1126, 7
    %v1128 = vsub.s32 2, %v1127
    %v1129 = vrot.slane %v939, %v1128
    %1131 = vbcast.lane.b32.xlu0 %v1129, 256
    %v1132 = vpop.permute.xlu0 %1131
    %v1133 = vlaneseq
    %v1134 = vshrl.u32 %v1133, 7
    %v1135 = vsub.s32 3, %v1134
    %v1136 = vrot.slane %v939, %v1135
    %1138 = vbcast.lane.b32.xlu0 %v1136, 256
    %v1139 = vpop.permute.xlu0 %1138
    %v1140 = vlaneseq
    %v1141 = vshrl.u32 %v1140, 7
    %v1142 = vsub.s32 4, %v1141
    %v1143 = vrot.slane %v939, %v1142
    %1145 = vbcast.lane.b32.xlu0 %v1143, 256
    %v1146 = vpop.permute.xlu0 %1145
    %v1147 = vlaneseq
    %v1148 = vshrl.u32 %v1147, 7
    %v1149 = vsub.s32 5, %v1148
    %v1150 = vrot.slane %v939, %v1149
    %1152 = vbcast.lane.b32.xlu0 %v1150, 256
    %v1153 = vpop.permute.xlu0 %1152
    %v1154 = vlaneseq
    %v1155 = vshrl.u32 %v1154, 7
    %v1156 = vsub.s32 6, %v1155
    %v1157 = vrot.slane %v939, %v1156
    %1159 = vbcast.lane.b32.xlu0 %v1157, 256
    %v1160 = vpop.permute.xlu0 %1159
    %v1161 = vlaneseq
    %v1162 = vshrl.u32 %v1161, 7
    %v1163 = vsub.s32 7, %v1162
    %v1164 = vrot.slane %v939, %v1163
    %1166 = vbcast.lane.b32.xlu0 %v1164, 256
    %v1167 = vpop.permute.xlu0 %1166
    %v1168 = vlaneseq
    %v1169 = vshrl.u32 %v1168, 7
    %v1170 = vsub.s32 0, %v1169
    %v1171 = vrot.slane %v940, %v1170
    %1173 = vbcast.lane.b32.xlu0 %v1171, 256
    %v1174 = vpop.permute.xlu0 %1173
    %v1175 = vlaneseq
    %v1176 = vshrl.u32 %v1175, 7
    %v1177 = vsub.s32 1, %v1176
    %v1178 = vrot.slane %v940, %v1177
    %1180 = vbcast.lane.b32.xlu0 %v1178, 256
    %v1181 = vpop.permute.xlu0 %1180
    %v1182 = vlaneseq
    %v1183 = vshrl.u32 %v1182, 7
    %v1184 = vsub.s32 2, %v1183
    %v1185 = vrot.slane %v940, %v1184
    %1187 = vbcast.lane.b32.xlu0 %v1185, 256
    %v1188 = vpop.permute.xlu0 %1187
    %v1189 = vlaneseq
    %v1190 = vshrl.u32 %v1189, 7
    %v1191 = vsub.s32 3, %v1190
    %v1192 = vrot.slane %v940, %v1191
    %1194 = vbcast.lane.b32.xlu0 %v1192, 256
    %v1195 = vpop.permute.xlu0 %1194
    %v1196 = vlaneseq
    %v1197 = vshrl.u32 %v1196, 7
    %v1198 = vsub.s32 4, %v1197
    %v1199 = vrot.slane %v940, %v1198
    %1201 = vbcast.lane.b32.xlu0 %v1199, 256
    %v1202 = vpop.permute.xlu0 %1201
    %v1203 = vlaneseq
    %v1204 = vshrl.u32 %v1203, 7
    %v1205 = vsub.s32 5, %v1204
    %v1206 = vrot.slane %v940, %v1205
    %1208 = vbcast.lane.b32.xlu0 %v1206, 256
    %v1209 = vpop.permute.xlu0 %1208
    %v1210 = vlaneseq
    %v1211 = vshrl.u32 %v1210, 7
    %v1212 = vsub.s32 6, %v1211
    %v1213 = vrot.slane %v940, %v1212
    %1215 = vbcast.lane.b32.xlu0 %v1213, 256
    %v1216 = vpop.permute.xlu0 %1215
    %v1217 = vlaneseq
    %v1218 = vshrl.u32 %v1217, 7
    %v1219 = vsub.s32 7, %v1218
    %v1220 = vrot.slane %v940, %v1219
    %1222 = vbcast.lane.b32.xlu0 %v1220, 256
    %v1223 = vpop.permute.xlu0 %1222
    %v1224 = vlaneseq
    %v1225 = vshrl.u32 %v1224, 7
    %v1226 = vsub.s32 0, %v1225
    %v1227 = vrot.slane %v941, %v1226
    %1229 = vbcast.lane.b32.xlu0 %v1227, 256
    %v1230 = vpop.permute.xlu0 %1229
    %v1231 = vlaneseq
    %v1232 = vshrl.u32 %v1231, 7
    %v1233 = vsub.s32 1, %v1232
    %v1234 = vrot.slane %v941, %v1233
    %1236 = vbcast.lane.b32.xlu0 %v1234, 256
    %v1237 = vpop.permute.xlu0 %1236
    %v1238 = vlaneseq
    %v1239 = vshrl.u32 %v1238, 7
    %v1240 = vsub.s32 2, %v1239
    %v1241 = vrot.slane %v941, %v1240
    %1243 = vbcast.lane.b32.xlu0 %v1241, 256
    %v1244 = vpop.permute.xlu0 %1243
    %v1245 = vlaneseq
    %v1246 = vshrl.u32 %v1245, 7
    %v1247 = vsub.s32 3, %v1246
    %v1248 = vrot.slane %v941, %v1247
    %1250 = vbcast.lane.b32.xlu0 %v1248, 256
    %v1251 = vpop.permute.xlu0 %1250
    %v1252 = vlaneseq
    %v1253 = vshrl.u32 %v1252, 7
    %v1254 = vsub.s32 4, %v1253
    %v1255 = vrot.slane %v941, %v1254
    %1257 = vbcast.lane.b32.xlu0 %v1255, 256
    %v1258 = vpop.permute.xlu0 %1257
    %v1259 = vlaneseq
    %v1260 = vshrl.u32 %v1259, 7
    %v1261 = vsub.s32 5, %v1260
    %v1262 = vrot.slane %v941, %v1261
    %1264 = vbcast.lane.b32.xlu0 %v1262, 256
    %v1265 = vpop.permute.xlu0 %1264
    %v1266 = vlaneseq
    %v1267 = vshrl.u32 %v1266, 7
    %v1268 = vsub.s32 6, %v1267
    %v1269 = vrot.slane %v941, %v1268
    %1271 = vbcast.lane.b32.xlu0 %v1269, 256
    %v1272 = vpop.permute.xlu0 %1271
    %v1273 = vlaneseq
    %v1274 = vshrl.u32 %v1273, 7
    %v1275 = vsub.s32 7, %v1274
    %v1276 = vrot.slane %v941, %v1275
    %1278 = vbcast.lane.b32.xlu0 %v1276, 256
    %v1279 = vpop.permute.xlu0 %1278
    %v1280 = vlaneseq
    %v1281 = vshrl.u32 %v1280, 7
    %v1282 = vsub.s32 0, %v1281
    %v1283 = vrot.slane %v942, %v1282
    %1285 = vbcast.lane.b32.xlu0 %v1283, 256
    %v1286 = vpop.permute.xlu0 %1285
    %v1287 = vlaneseq
    %v1288 = vshrl.u32 %v1287, 7
    %v1289 = vsub.s32 1, %v1288
    %v1290 = vrot.slane %v942, %v1289
    %1292 = vbcast.lane.b32.xlu0 %v1290, 256
    %v1293 = vpop.permute.xlu0 %1292
    %v1294 = vlaneseq
    %v1295 = vshrl.u32 %v1294, 7
    %v1296 = vsub.s32 2, %v1295
    %v1297 = vrot.slane %v942, %v1296
    %1299 = vbcast.lane.b32.xlu0 %v1297, 256
    %v1300 = vpop.permute.xlu0 %1299
    %v1301 = vlaneseq
    %v1302 = vshrl.u32 %v1301, 7
    %v1303 = vsub.s32 3, %v1302
    %v1304 = vrot.slane %v942, %v1303
    %1306 = vbcast.lane.b32.xlu0 %v1304, 256
    %v1307 = vpop.permute.xlu0 %1306
    %v1308 = vlaneseq
    %v1309 = vshrl.u32 %v1308, 7
    %v1310 = vsub.s32 4, %v1309
    %v1311 = vrot.slane %v942, %v1310
    %1313 = vbcast.lane.b32.xlu0 %v1311, 256
    %v1314 = vpop.permute.xlu0 %1313
    %v1315 = vlaneseq
    %v1316 = vshrl.u32 %v1315, 7
    %v1317 = vsub.s32 5, %v1316
    %v1318 = vrot.slane %v942, %v1317
    %1320 = vbcast.lane.b32.xlu0 %v1318, 256
    %v1321 = vpop.permute.xlu0 %1320
    %v1322 = vlaneseq
    %v1323 = vshrl.u32 %v1322, 7
    %v1324 = vsub.s32 6, %v1323
    %v1325 = vrot.slane %v942, %v1324
    %1327 = vbcast.lane.b32.xlu0 %v1325, 256
    %v1328 = vpop.permute.xlu0 %1327
    %v1329 = vlaneseq
    %v1330 = vshrl.u32 %v1329, 7
    %v1331 = vsub.s32 7, %v1330
    %v1332 = vrot.slane %v942, %v1331
    %1334 = vbcast.lane.b32.xlu0 %v1332, 256
    %v1335 = vpop.permute.xlu0 %1334
    %v1336 = vlaneseq
    %v1337 = vshrl.u32 %v1336, 7
    %v1338 = vsub.s32 0, %v1337
    %v1339 = vrot.slane %v943, %v1338
    %1341 = vbcast.lane.b32.xlu0 %v1339, 256
    %v1342 = vpop.permute.xlu0 %1341
    %v1343 = vlaneseq
    %v1344 = vshrl.u32 %v1343, 7
    %v1345 = vsub.s32 1, %v1344
    %v1346 = vrot.slane %v943, %v1345
    %1348 = vbcast.lane.b32.xlu0 %v1346, 256
    %v1349 = vpop.permute.xlu0 %1348
    %v1350 = vlaneseq
    %v1351 = vshrl.u32 %v1350, 7
    %v1352 = vsub.s32 2, %v1351
    %v1353 = vrot.slane %v943, %v1352
    %1355 = vbcast.lane.b32.xlu0 %v1353, 256
    %v1356 = vpop.permute.xlu0 %1355
    %v1357 = vlaneseq
    %v1358 = vshrl.u32 %v1357, 7
    %v1359 = vsub.s32 3, %v1358
    %v1360 = vrot.slane %v943, %v1359
    %1362 = vbcast.lane.b32.xlu0 %v1360, 256
    %v1363 = vpop.permute.xlu0 %1362
    %v1364 = vlaneseq
    %v1365 = vshrl.u32 %v1364, 7
    %v1366 = vsub.s32 4, %v1365
    %v1367 = vrot.slane %v943, %v1366
    %1369 = vbcast.lane.b32.xlu0 %v1367, 256
    %v1370 = vpop.permute.xlu0 %1369
    %v1371 = vlaneseq
    %v1372 = vshrl.u32 %v1371, 7
    %v1373 = vsub.s32 5, %v1372
    %v1374 = vrot.slane %v943, %v1373
    %1376 = vbcast.lane.b32.xlu0 %v1374, 256
    %v1377 = vpop.permute.xlu0 %1376
    %v1378 = vlaneseq
    %v1379 = vshrl.u32 %v1378, 7
    %v1380 = vsub.s32 6, %v1379
    %v1381 = vrot.slane %v943, %v1380
    %1383 = vbcast.lane.b32.xlu0 %v1381, 256
    %v1384 = vpop.permute.xlu0 %1383
    %v1385 = vlaneseq
    %v1386 = vshrl.u32 %v1385, 7
    %v1387 = vsub.s32 7, %v1386
    %v1388 = vrot.slane %v943, %v1387
    %1390 = vbcast.lane.b32.xlu0 %v1388, 256
    %v1391 = vpop.permute.xlu0 %1390
    %v1392 = vmul.f32 %v29, %v950
    %v1393 = vmul.f32 %v30, %v957
    %v1394 = vmul.f32 %v31, %v964
    %v1395 = vmul.f32 %v32, %v971
    %v1396 = vmul.f32 %v33, %v978
    %v1397 = vmul.f32 %v34, %v985
    %v1398 = vmul.f32 %v35, %v992
    %v1399 = vmul.f32 %v36, %v999
    %v1400 = vmul.f32 %v37, %v1006
    %v1401 = vmul.f32 %v38, %v1013
    %v1402 = vmul.f32 %v39, %v1020
    %v1403 = vmul.f32 %v40, %v1027
    %v1404 = vmul.f32 %v41, %v1034
    %v1405 = vmul.f32 %v42, %v1041
    %v1406 = vmul.f32 %v43, %v1048
    %v1407 = vmul.f32 %v44, %v1055
    %v1408 = vmul.f32 %v45, %v1062
    %v1409 = vmul.f32 %v46, %v1069
    %v1410 = vmul.f32 %v47, %v1076
    %v1411 = vmul.f32 %v48, %v1083
    %v1412 = vmul.f32 %v49, %v1090
    %v1413 = vmul.f32 %v50, %v1097
    %v1414 = vmul.f32 %v51, %v1104
    %v1415 = vmul.f32 %v52, %v1111
    %v1416 = vmul.f32 %v53, %v1118
    %v1417 = vmul.f32 %v54, %v1125
    %v1418 = vmul.f32 %v55, %v1132
    %v1419 = vmul.f32 %v56, %v1139
    %v1420 = vmul.f32 %v57, %v1146
    %v1421 = vmul.f32 %v58, %v1153
    %v1422 = vmul.f32 %v59, %v1160
    %v1423 = vmul.f32 %v60, %v1167
    %v1424 = vmul.f32 %v61, %v1174
    %v1425 = vmul.f32 %v62, %v1181
    %v1426 = vmul.f32 %v63, %v1188
    %v1427 = vmul.f32 %v64, %v1195
    %v1428 = vmul.f32 %v65, %v1202
    %v1429 = vmul.f32 %v66, %v1209
    %v1430 = vmul.f32 %v67, %v1216
    %v1431 = vmul.f32 %v68, %v1223
    %v1432 = vmul.f32 %v69, %v1230
    %v1433 = vmul.f32 %v70, %v1237
    %v1434 = vmul.f32 %v71, %v1244
    %v1435 = vmul.f32 %v72, %v1251
    %v1436 = vmul.f32 %v73, %v1258
    %v1437 = vmul.f32 %v74, %v1265
    %v1438 = vmul.f32 %v75, %v1272
    %v1439 = vmul.f32 %v76, %v1279
    %v1440 = vmul.f32 %v77, %v1286
    %v1441 = vmul.f32 %v78, %v1293
    %v1442 = vmul.f32 %v79, %v1300
    %v1443 = vmul.f32 %v80, %v1307
    %v1444 = vmul.f32 %v81, %v1314
    %v1445 = vmul.f32 %v82, %v1321
    %v1446 = vmul.f32 %v83, %v1328
    %v1447 = vmul.f32 %v84, %v1335
    %v1448 = vmul.f32 %v85, %v1342
    %v1449 = vmul.f32 %v86, %v1349
    %v1450 = vmul.f32 %v87, %v1356
    %v1451 = vmul.f32 %v88, %v1363
    %v1452 = vmul.f32 %v89, %v1370
    %v1453 = vmul.f32 %v90, %v1377
    %v1454 = vmul.f32 %v91, %v1384
    %v1455 = vmul.f32 %v92, %v1391
    %1456 = vst [vmem:[#allocation5] sm:$0xff] %v1392
    %1457 = vst [vmem:[#allocation5 + $0x8] sm:$0xff] %v1393
    %1458 = vst [vmem:[#allocation5 + $0x10] sm:$0xff] %v1394
    %1459 = vst [vmem:[#allocation5 + $0x18] sm:$0xff] %v1395
    %1460 = vst [vmem:[#allocation5 + $0x20] sm:$0xff] %v1396
    %1461 = vst [vmem:[#allocation5 + $0x28] sm:$0xff] %v1397
    %1462 = vst [vmem:[#allocation5 + $0x30] sm:$0xff] %v1398
    %1463 = vst [vmem:[#allocation5 + $0x38] sm:$0xff] %v1399
    %1464 = vst [vmem:[#allocation5 + $0x40] sm:$0xff] %v1400
    %1465 = vst [vmem:[#allocation5 + $0x48] sm:$0xff] %v1401
    %1466 = vst [vmem:[#allocation5 + $0x50] sm:$0xff] %v1402
    %1467 = vst [vmem:[#allocation5 + $0x58] sm:$0xff] %v1403
    %1468 = vst [vmem:[#allocation5 + $0x60] sm:$0xff] %v1404
    %1469 = vst [vmem:[#allocation5 + $0x68] sm:$0xff] %v1405
    %1470 = vst [vmem:[#allocation5 + $0x70] sm:$0xff] %v1406
    %1471 = vst [vmem:[#allocation5 + $0x78] sm:$0xff] %v1407
    %1472 = vst [vmem:[#allocation5 + $0x80] sm:$0xff] %v1408
    %1473 = vst [vmem:[#allocation5 + $0x88] sm:$0xff] %v1409
    %1474 = vst [vmem:[#allocation5 + $0x90] sm:$0xff] %v1410
    %1475 = vst [vmem:[#allocation5 + $0x98] sm:$0xff] %v1411
    %1476 = vst [vmem:[#allocation5 + $0xa0] sm:$0xff] %v1412
    %1477 = vst [vmem:[#allocation5 + $0xa8] sm:$0xff] %v1413
    %1478 = vst [vmem:[#allocation5 + $0xb0] sm:$0xff] %v1414
    %1479 = vst [vmem:[#allocation5 + $0xb8] sm:$0xff] %v1415
    %1480 = vst [vmem:[#allocation5 + $0xc0] sm:$0xff] %v1416
    %1481 = vst [vmem:[#allocation5 + $0xc8] sm:$0xff] %v1417
    %1482 = vst [vmem:[#allocation5 + $0xd0] sm:$0xff] %v1418
    %1483 = vst [vmem:[#allocation5 + $0xd8] sm:$0xff] %v1419
    %1484 = vst [vmem:[#allocation5 + $0xe0] sm:$0xff] %v1420
    %1485 = vst [vmem:[#allocation5 + $0xe8] sm:$0xff] %v1421
    %1486 = vst [vmem:[#allocation5 + $0xf0] sm:$0xff] %v1422
    %1487 = vst [vmem:[#allocation5 + $0xf8] sm:$0xff] %v1423
    %1488 = vst [vmem:[#allocation5 + $0x100] sm:$0xff] %v1424
    %1489 = vst [vmem:[#allocation5 + $0x108] sm:$0xff] %v1425
    %1490 = vst [vmem:[#allocation5 + $0x110] sm:$0xff] %v1426
    %1491 = vst [vmem:[#allocation5 + $0x118] sm:$0xff] %v1427
    %1492 = vst [vmem:[#allocation5 + $0x120] sm:$0xff] %v1428
    %1493 = vst [vmem:[#allocation5 + $0x128] sm:$0xff] %v1429
    %1494 = vst [vmem:[#allocation5 + $0x130] sm:$0xff] %v1430
    %1495 = vst [vmem:[#allocation5 + $0x138] sm:$0xff] %v1431
    %1496 = vst [vmem:[#allocation5 + $0x140] sm:$0xff] %v1432
    %1497 = vst [vmem:[#allocation5 + $0x148] sm:$0xff] %v1433
    %1498 = vst [vmem:[#allocation5 + $0x150] sm:$0xff] %v1434
    %1499 = vst [vmem:[#allocation5 + $0x158] sm:$0xff] %v1435
    %1500 = vst [vmem:[#allocation5 + $0x160] sm:$0xff] %v1436
    %1501 = vst [vmem:[#allocation5 + $0x168] sm:$0xff] %v1437
    %1502 = vst [vmem:[#allocation5 + $0x170] sm:$0xff] %v1438
    %1503 = vst [vmem:[#allocation5 + $0x178] sm:$0xff] %v1439
    %1504 = vst [vmem:[#allocation5 + $0x180] sm:$0xff] %v1440
    %1505 = vst [vmem:[#allocation5 + $0x188] sm:$0xff] %v1441
    %1506 = vst [vmem:[#allocation5 + $0x190] sm:$0xff] %v1442
    %1507 = vst [vmem:[#allocation5 + $0x198] sm:$0xff] %v1443
    %1508 = vst [vmem:[#allocation5 + $0x1a0] sm:$0xff] %v1444
    %1509 = vst [vmem:[#allocation5 + $0x1a8] sm:$0xff] %v1445
    %1510 = vst [vmem:[#allocation5 + $0x1b0] sm:$0xff] %v1446
    %1511 = vst [vmem:[#allocation5 + $0x1b8] sm:$0xff] %v1447
    %1512 = vst [vmem:[#allocation5 + $0x1c0] sm:$0xff] %v1448
    %1513 = vst [vmem:[#allocation5 + $0x1c8] sm:$0xff] %v1449
    %1514 = vst [vmem:[#allocation5 + $0x1d0] sm:$0xff] %v1450
    %1515 = vst [vmem:[#allocation5 + $0x1d8] sm:$0xff] %v1451
    %1516 = vst [vmem:[#allocation5 + $0x1e0] sm:$0xff] %v1452
    %1517 = vst [vmem:[#allocation5 + $0x1e8] sm:$0xff] %v1453
    %1518 = vst [vmem:[#allocation5 + $0x1f0] sm:$0xff] %v1454
    %1519 = vst [vmem:[#allocation5 + $0x1f8] sm:$0xff] %v1455
    // Predicated region
    $region18: #{tpu_custom_call.1} parent=1 // pred_check
      _
    $region19: #{tpu_custom_call.1} parent=1 // pred_check_branch
      %1521 = sbr.rel (0) target = $region21
    $region20: #{tpu_custom_call.1} parent=1 // pred_region
      %s1523 = ssub.s32 8192, 8192
      %1524 = vsyncadd [#allocation4], %s1523
      %s1525 = sshll.u32 [#allocation5], 4
      %s1526 = int_to_ptr.vmem [resolvable:$true] %s1525
      %1531 = dma.vmem_to_hbm [thread:$0]  %s1526, 8192, %s3, [#allocation4], 128, 128, 8
    $region21: #{tpu_custom_call.1} parent=1 // pred_fallthru
      _
    // Predicated region
    $region22: #{tpu_custom_call.1} parent=1 // pred_check
      _
    $region23: #{tpu_custom_call.1} parent=1 // pred_check_branch
      %1533 = sbr.rel (0) target = $region25
    $region24: #{tpu_custom_call.1} parent=1 // pred_region
      %1534 = dma.done [#allocation4], 8192
    $region25: #{tpu_custom_call.1} parent=1 // pred_fallthru
      _
    %1535 = vsyncpa [#allocation3], 1
    %1536 = vsyncpa [#allocation4], 1

</llo_original>
